<compile_context>
chip_gen: v7x
topology: tpu7x:2x2x1
jax: 0.10.0
libtpu: 0.0.40
codegen_flags: <defaults>
</compile_context>

<pallas_src>
import functools

import jax
import jax.numpy as jnp
from jax import lax
from jax.experimental import pallas as pl
from jax.experimental.pallas import tpu as pltpu


def _round_up(x, m):
    return ((x + m - 1) // m) * m


# ---------------------------------------------------------------------------
# Row L2-normalization kernel (run once for x and once for W; hoisted out of
# the tiled loss loop so it is never recomputed per grid step).
# ---------------------------------------------------------------------------
def _row_normalize_kernel(x_ref, o_ref, *, eps):
    x = x_ref[...].astype(jnp.float32)
    nrm = jnp.sqrt(jnp.sum(x * x, axis=1, keepdims=True))
    if eps > 0.0:
        # F.normalize semantics: x / max(||x||, eps). (Weight path uses eps=0
        # == plain torch.norm division.)
        nrm = jnp.maximum(nrm, eps)
    o_ref[...] = (x / nrm).astype(o_ref.dtype)


def _row_normalize(x, *, eps, row_tile, out_dtype):
    rows, d = x.shape
    assert rows % row_tile == 0 and d % 128 == 0
    return pl.pallas_call(
        functools.partial(_row_normalize_kernel, eps=eps),
        out_shape=jax.ShapeDtypeStruct((rows, d), out_dtype),
        grid_spec=pltpu.PrefetchScalarGridSpec(
            num_scalar_prefetch=0,
            grid=(rows // row_tile,),
            in_specs=[pl.BlockSpec((row_tile, d), lambda i: (i, 0))],
            out_specs=pl.BlockSpec((row_tile, d), lambda i: (i, 0)),
        ),
        compiler_params=pltpu.CompilerParams(dimension_semantics=("parallel",)),
    )(x)


# ---------------------------------------------------------------------------
# Main LMCL kernel: grid = (N tiles, C tiles), C last + "arbitrary".
# ---------------------------------------------------------------------------
def _lmcl_kernel(xn_ref, wn_ref, b_ref, lab_ref, by_ref, L_ref,
                 mmy_acc, excl_acc, *, s, m, c_tile, num_classes, c_padded):
    c = pl.program_id(1)

    @pl.when(c == 0)
    def _init():
        mmy_acc[...] = jnp.zeros_like(mmy_acc)
        excl_acc[...] = jnp.zeros_like(excl_acc)

    # cos(theta) tile (N_TILE, C_TILE): contract last dims so W keeps its
    # natural (C_TILE, D) layout — no transpose through the XLU.
    mm = lax.dot_general(
        xn_ref[...], wn_ref[...],
        dimension_numbers=(((1,), (1,)), ((), ())),
        preferred_element_type=jnp.float32,
    )
    n_tile = mm.shape[0]

    col = c * c_tile + lax.broadcasted_iota(jnp.int32, (n_tile, c_tile), 1)
    onehot = col == lab_ref[...]                         # (N_TILE, C_TILE)

    # wf = mm + b  =>  exp(s*wf + b) == exp(s*mm + (s+1)*b): no (N,C) bias
    # broadcast materialization, just a (1, C_TILE) row broadcast.
    z = s * mm + (s + 1.0) * b_ref[...]
    exp_z = jnp.exp(z)

    excl_mask = jnp.logical_not(onehot)
    if c_padded != num_classes:                          # static: padding exists
        excl_mask = excl_mask & (col < num_classes)

    # Online accumulation across C tiles.
    mmy_acc[...] += jnp.sum(jnp.where(onehot, mm, 0.0), axis=1, keepdims=True)
    excl_acc[...] += jnp.sum(jnp.where(excl_mask, exp_z, 0.0),
                             axis=1, keepdims=True)

    @pl.when(c == pl.num_programs(1) - 1)
    def _finalize():
        b_y = by_ref[...]                                # bias[labels], (N_TILE, 1)
        # numerator = s*(wf_y - m) + b_y with wf_y = mm_y + b_y
        # (bias intentionally double-counted for the target class, as in torch).
        numerator = s * (mmy_acc[...] - m) + (s + 1.0) * b_y
        denom = jnp.exp(numerator) + excl_acc[...]
        L_ref[...] = numerator - jnp.log(denom)


def lmcl_loss(x, weight, bias, labels, s=64.0, m=1.35, *,
              n_tile=128, c_tile=512, matmul_dtype=jnp.float32,
              weight_buffers=None, vmem_limit_bytes=None):
    """x: (N, D); weight: (C, D); bias: (C,); labels: (N,) int.

    n_tile / c_tile: batch / class tile sizes (auto-clamped & aligned).
      For v7x (64 MiB VMEM) keep c_tile*D*4B*2 well under the scoped limit.
    matmul_dtype: jnp.bfloat16 streams normalized x/W as bf16 (halves HBM
      traffic, fast MXU path); accumulation stays f32.
    weight_buffers: e.g. 3 on v5e for a deeper weight DMA pipeline.
    vmem_limit_bytes: raise the scoped VMEM limit (useful on v5e, default 16 MiB).
    """
    x = jnp.asarray(x, jnp.float32)
    weight = jnp.asarray(weight, jnp.float32)
    bias = jnp.asarray(bias, jnp.float32).reshape(-1)
    labels = jnp.asarray(labels, jnp.int32).reshape(-1)

    N, D = x.shape
    C = weight.shape[0]

    # ---- lane/sublane-aligned padded shapes --------------------------------
    Dp = _round_up(D, 128)
    n_tile = _round_up(min(n_tile, _round_up(N, 16)), 16)
    c_tile = _round_up(min(c_tile, _round_up(C, 128)), 128)
    Np = _round_up(N, n_tile)
    Cp = _round_up(C, c_tile)

    x_p = jnp.zeros((Np, Dp), jnp.float32).at[:N, :D].set(x)
    w_p = jnp.zeros((Cp, Dp), jnp.float32).at[:C, :D].set(weight)
    b_p = jnp.zeros((1, Cp), jnp.float32).at[0, :C].set(bias)
    lab_p = jnp.zeros((Np, 1), jnp.int32).at[:N, 0].set(labels)
    b_y = jnp.take(b_p[0], lab_p[:, 0]).reshape(Np, 1)   # bias[labels]

    # ---- pre-normalize rows once (hoisted out of the tiled loss loop) ------
    xn = _row_normalize(x_p, eps=1e-12, row_tile=n_tile, out_dtype=matmul_dtype)
    wn = _row_normalize(w_p, eps=0.0, row_tile=c_tile, out_dtype=matmul_dtype)
    if Cp > C:
        # Padded weight rows have zero norm -> 0/0; zero them so padded logit
        # columns are exactly 0 (they are masked out of the sum anyway).
        wn = wn.at[C:, :].set(0.0)

    grid = (Np // n_tile, Cp // c_tile)

    w_spec_kwargs = {}
    if weight_buffers is not None:
        w_spec_kwargs["pipeline_mode"] = pl.Buffered(weight_buffers)
    w_spec = pl.BlockSpec((c_tile, Dp), lambda i, c: (c, 0), **w_spec_kwargs)

    kernel = functools.partial(
        _lmcl_kernel, s=float(s), m=float(m), c_tile=c_tile,
        num_classes=C, c_padded=Cp)

    L = pl.pallas_call(
        kernel,
        out_shape=jax.ShapeDtypeStruct((Np, 1), jnp.float32),
        grid_spec=pltpu.PrefetchScalarGridSpec(
            num_scalar_prefetch=0,
            grid=grid,
            in_specs=[
                pl.BlockSpec((n_tile, Dp), lambda i, c: (i, 0)),   # xn
                w_spec,                                            # wn (streamed)
                pl.BlockSpec((1, c_tile), lambda i, c: (0, c)),    # bias row
                pl.BlockSpec((n_tile, 1), lambda i, c: (i, 0)),    # labels
                pl.BlockSpec((n_tile, 1), lambda i, c: (i, 0)),    # bias[labels]
            ],
            out_specs=pl.BlockSpec((n_tile, 1), lambda i, c: (i, 0)),
            scratch_shapes=[
                pltpu.VMEM((n_tile, 1), jnp.float32),   # target logit accumulator
                pltpu.VMEM((n_tile, 1), jnp.float32),   # sum_{j!=y} exp accumulator
            ],
        ),
        compiler_params=pltpu.CompilerParams(
            dimension_semantics=("parallel", "arbitrary"),
            vmem_limit_bytes=vmem_limit_bytes,
        ),
    )(xn, wn, b_p, lab_p, b_y)

    # Final mean over the real rows (wrapper keeps the batch grid axis
    # race-free under megacore).
    return -jnp.mean(L[:N, 0])


# ---------------------------------------------------------------------------
# Plain-JAX reference mirroring the PyTorch module.
# ---------------------------------------------------------------------------
def lmcl_loss_ref(x, weight, bias, labels, s=64.0, m=1.35):
    xn = x / jnp.maximum(jnp.linalg.norm(x, axis=1, keepdims=True), 1e-12)
    wn = weight / jnp.linalg.norm(weight, axis=1, keepdims=True)
    wf = xn @ wn.T + bias[None, :]
    N, C = wf.shape
    onehot = jax.nn.one_hot(labels, C, dtype=bool)
    logit_y = jnp.sum(jnp.where(onehot, wf, 0.0), axis=1)
    b_y = bias[labels]
    numerator = s * (logit_y - m) + b_y
    exp_all = jnp.exp(s * wf + bias[None, :])
    sum_excl = jnp.sum(jnp.where(onehot, 0.0, exp_all), axis=1)
    denom = jnp.exp(numerator) + sum_excl
    L = numerator - jnp.log(denom)
    return -jnp.mean(L)


if __name__ == "__main__":
    def make_inputs(key, N, D, C):
        kx, kw, kb, kl = jax.random.split(key, 4)
        x = jax.random.normal(kx, (N, D), dtype=jnp.float32)
        bound = 1.0 / (D ** 0.5)          # nn.Linear-style init
        w = jax.random.uniform(kw, (C, D), minval=-bound, maxval=bound,
                               dtype=jnp.float32)
        b = jax.random.uniform(kb, (C,), minval=-bound, maxval=bound,
                               dtype=jnp.float32)
        lab = jax.random.randint(kl, (N,), 0, C, dtype=jnp.int32)
        return x, w, b, lab

    # 1) Tiny shapes (single-tile grid), f32 matmul.
    x, w, b, lab = make_inputs(jax.random.PRNGKey(0), 8, 32, 16)
    loss = lmcl_loss(x, w, b, lab)
    jax.block_until_ready(loss)
    ref = lmcl_loss_ref(x, w, b, lab)
    assert jnp.allclose(loss, ref, rtol=1e-4, atol=1e-3), (loss, ref)

    # 2) Shapes that exercise the (N, C) grid and the online C accumulation
    #    (3 batch tiles x 3 class tiles), f32 matmul.
    x2, w2, b2, lab2 = make_inputs(jax.random.PRNGKey(1), 48, 64, 300)
    loss2 = lmcl_loss(x2, w2, b2, lab2, n_tile=16, c_tile=128)
    jax.block_until_ready(loss2)
    ref2 = lmcl_loss_ref(x2, w2, b2, lab2)
    assert jnp.allclose(loss2, ref2, rtol=1e-4, atol=1e-3), (loss2, ref2)

    # 3) bf16 weight/activation streaming + MXU fast path (looser tolerance:
    #    logits are scaled by s=64).
    loss3 = lmcl_loss(x2, w2, b2, lab2, n_tile=16, c_tile=128,
                      matmul_dtype=jnp.bfloat16)
    jax.block_until_ready(loss3)
    assert jnp.allclose(loss3, ref2, rtol=5e-2, atol=0.5), (loss3, ref2)

    print("KERNEL_OK")
</pallas_src>

<mosaic_0001>
module attributes {stable_mosaic.version = 11 : i64} {
  func.func @_row_normalize_kernel(%arg0: i32, %arg1: memref<16x128xf32, #tpu.memory_space<vmem>>, %arg2: memref<16x128xf32, #tpu.memory_space<vmem>>) attributes {dimension_semantics = [#tpu.dimension_semantics<parallel>], iteration_bounds = array<i64: 1>, scalar_prefetch = 0 : i64, scratch_operands = 0 : i64, tpu.core_type = #tpu.core_type<tc>, window_params = [{transform_indices = @transform_0, window_bounds = array<i64: 16, 128>}, {transform_indices = @transform_1, window_bounds = array<i64: 16, 128>}]} {
    %c0 = arith.constant 0 : index
    %c0_0 = arith.constant 0 : index
    %0 = vector.load %arg1[%c0, %c0_0] : memref<16x128xf32, #tpu.memory_space<vmem>>, vector<16x128xf32>
    %1 = arith.mulf %0, %0 : vector<16x128xf32>
    %cst = arith.constant dense<0.000000e+00> : vector<16xf32>
    %2 = vector.multi_reduction <add>, %1, %cst [1] : vector<16x128xf32> to vector<16xf32>
    %3 = vector.shape_cast %2 : vector<16xf32> to vector<16x1xf32>
    %4 = math.sqrt %3 : vector<16x1xf32>
    %cst_1 = arith.constant 9.99999996E-13 : f32
    %5 = vector.broadcast %cst_1 : f32 to vector<16x1xf32>
    %6 = arith.maximumf %4, %5 : vector<16x1xf32>
    %7 = vector.broadcast %6 : vector<16x1xf32> to vector<16x128xf32>
    %8 = arith.divf %0, %7 : vector<16x128xf32>
    %c0_2 = arith.constant 0 : index
    %c0_3 = arith.constant 0 : index
    %9 = vector.load %arg2[%c0_2, %c0_3] : memref<16x128xf32, #tpu.memory_space<vmem>>, vector<16x128xf32>
    tpu.vector_store %arg2[%c0_2, %c0_3], %8 {strides = array<i32>} : memref<16x128xf32, #tpu.memory_space<vmem>>, vector<16x128xf32>,
    return
  }
  func.func @transform_0(%arg0: i32) -> (i32, i32) {
    %c0_i32 = arith.constant 0 : i32
    %c0_i32_0 = arith.constant 0 : i32
    return %arg0, %c0_i32 : i32, i32
  }
  func.func @transform_1(%arg0: i32) -> (i32, i32) {
    %c0_i32 = arith.constant 0 : i32
    %c0_i32_0 = arith.constant 0 : i32
    return %arg0, %c0_i32 : i32, i32
  }
}

</mosaic_0001>

<llo_original>
// kernel: tpu_custom_call.1
$region0: #{tpu_custom_call.1}
  #allocation0 [shape = 'u32[]', space=smem, size = 0x4, offset = 0x4, fixed_abs, tag = 'smem constant byte address 0x4 - core index']
  #allocation1 [shape = 'u32[144,128]{1,0:T(1,128)}', space=vmem, size = 0x12000, scoped, tag = 'internal scratch']
  %s0 = inlined_call_operand.hbm [shape: f32[16,128], index: 0, kind: input, shape index: {}]
  %s1 = inlined_call_operand.hbm [shape: f32[16,128], index: 1, kind: output, shape index: {}]
  %s2 = sld [smem:[#allocation0]]
  $region18: #{tpu_custom_call.1} parent=0
    _
  %s4 = ssub.s32 1, %s2
  %s5 = scalar_select 0, %s4, %s2
  $region1: #{tpu_custom_call.1} parent=0
    #allocation2 [shape = 'u8[8192]{0}', space=vmem, size = 0x2000, scoped, tag = 'input window, operand 0, single buffered']
    #allocation3 [shape = 's32[1]{0}', space=sflag, size = 0x4, scoped, tag = 'scoped memory for tpu_custom_call.1']
    #allocation4 [shape = 's32[1]{0}', space=sflag, size = 0x4, scoped, tag = 'scoped memory for tpu_custom_call.1']
    #allocation5 [shape = 'u8[8192]{0}', space=vmem, size = 0x2000, scoped, tag = 'output window, operand 0, single buffered']
    %6 = vsyncpa [#allocation3], 0
    %7 = vsyncpa [#allocation4], 0
    // Predicated region
    $region2: #{tpu_custom_call.1} parent=1 // pred_check
      _
    $region3: #{tpu_custom_call.1} parent=1 // pred_check_branch
      %9 = sbr.rel (0) target = $region5
    $region4: #{tpu_custom_call.1} parent=1 // pred_region
      %s11 = ssub.s32 256, 256
      %12 = vsyncadd [#allocation3], %s11
      %s13 = sshll.u32 [#allocation2], 4
      %s14 = int_to_ptr.vmem [resolvable:$true] %s13
      %19 = dma.hbm_to_vmem [thread:$0]  %s0, 256, %s14, [#allocation3], 128, 128, 8
    $region5: #{tpu_custom_call.1} parent=1 // pred_fallthru
      _
    // Predicated region
    $region6: #{tpu_custom_call.1} parent=1 // pred_check
      _
    $region7: #{tpu_custom_call.1} parent=1 // pred_check_branch
      %21 = sbr.rel (0) target = $region9
    $region8: #{tpu_custom_call.1} parent=1 // pred_region
      %22 = dma.done [#allocation3], 256
    $region9: #{tpu_custom_call.1} parent=1 // pred_fallthru
      _
    %v23 = vld [vmem:[#allocation2] sm:$0xff]
    %v24 = vld [vmem:[#allocation2 + $0x8] sm:$0xff]
    %v25 = vmul.f32 %v23, %v23
    %v26 = vmul.f32 %v24, %v24
    %27 = vadd.xlane.f32.xlu0 %v25
    %v28 = vpop.xlane.xlu0 %27
    %29 = vadd.xlane.f32.xlu0 %v26
    %v30 = vpop.xlane.xlu0 %29
    %v31 = vrsqrt.pop %v28
    %v32 = vmul.f32 %v28, %v31
    %vm33 = vcmp.eq.f32.partialorder %v28, inf
    %v34 = vsel %vm33, %v28, %v32
    %vm35 = vcmp.eq.f32.partialorder %v28, 0.0
    %v36 = vand.u32 %v28, 2147483648
    %v37 = vsel %vm35, %v36, %v34
    %v38 = vrsqrt.pop %v30
    %v39 = vmul.f32 %v30, %v38
    %vm40 = vcmp.eq.f32.partialorder %v30, inf
    %v41 = vsel %vm40, %v30, %v39
    %vm42 = vcmp.eq.f32.partialorder %v30, 0.0
    %v43 = vand.u32 %v30, 2147483648
    %v44 = vsel %vm42, %v43, %v41
    %v45 = vmax.f32 %v37, 1e-12
    %v46 = vmax.f32 %v44, 1e-12
    %v47 = vrcp.pop %v45
    %v48 = vmul.f32 %v23, %v47
    %v49 = vrcp.pop %v46
    %v50 = vmul.f32 %v24, %v49
    %51 = vst [vmem:[#allocation5] sm:$0xff] %v48
    %52 = vst [vmem:[#allocation5 + $0x8] sm:$0xff] %v50
    // Predicated region
    $region10: #{tpu_custom_call.1} parent=1 // pred_check
      _
    $region11: #{tpu_custom_call.1} parent=1 // pred_check_branch
      %54 = sbr.rel (0) target = $region13
    $region12: #{tpu_custom_call.1} parent=1 // pred_region
      %s56 = ssub.s32 256, 256
      %57 = vsyncadd [#allocation4], %s56
      %s58 = sshll.u32 [#allocation5], 4
      %s59 = int_to_ptr.vmem [resolvable:$true] %s58
      %64 = dma.vmem_to_hbm [thread:$0]  %s59, 256, %s1, [#allocation4], 128, 128, 8
    $region13: #{tpu_custom_call.1} parent=1 // pred_fallthru
      _
    // Predicated region
    $region14: #{tpu_custom_call.1} parent=1 // pred_check
      _
    $region15: #{tpu_custom_call.1} parent=1 // pred_check_branch
      %66 = sbr.rel (0) target = $region17
    $region16: #{tpu_custom_call.1} parent=1 // pred_region
      %67 = dma.done [#allocation4], 256
    $region17: #{tpu_custom_call.1} parent=1 // pred_fallthru
      _
    %68 = vsyncpa [#allocation3], 1
    %69 = vsyncpa [#allocation4], 1

</llo_original>
